<compile_context>
chip_gen: v6e
topology: v6e:2x2x1
jax: 0.10.0
libtpu: 0.0.40
codegen_flags: <defaults>
</compile_context>

<pallas_src>
import functools

import jax
import jax.numpy as jnp
from jax.experimental import pallas as pl
from jax.experimental.pallas import tpu as pltpu


# ----------------------------------------------------------------------------
# Fused kernel: q_sample + noise-predictor stand-in + L1 loss
# ----------------------------------------------------------------------------
def _fused_ddpm_kernel(C, BHW, inv_total,
                       x_ref, n_ref, sa_ref, s1_ref, t_ref, w_ref, b_ref,
                       noisy_ref, pred_ref, loss_ref):
    # x_ref / n_ref / noisy_ref / pred_ref : (C, B*HW) f32 in VMEM (lane-dense)
    # sa_ref / s1_ref / t_ref              : (1, B*HW) f32 (per-batch rows)
    # b_ref                                : (C, 1)    f32 (per-channel bias)
    # w_ref                                : (C, C)    f32 (1x1-conv weights)
    x = x_ref[...]
    n = n_ref[...]

    # --- forward diffusion (q_sample): x*sqrt_ac[t] + noise*sqrt_1mac[t] -----
    # sa/s1 vary only along the lane (batch*pixel) axis -> sublane broadcast.
    noisy = x * sa_ref[...] + n * s1_ref[...]
    noisy_ref[...] = noisy.astype(noisy_ref.dtype)

    # --- noise-predictor stand-in: 1x1-conv channel mix on the VPU ----------
    # pred[o, :] = sum_c w[o, c] * noisy[c, :]  ==  sum_c  w[:, c] (x) noisy[c, :]
    # C = 4 is far too small for the MXU; 4 outer-product FMAs on (C, B*HW).
    w = w_ref[...]
    pred = jnp.zeros((C, BHW), dtype=jnp.float32)
    for c in range(C):
        w_col = jnp.broadcast_to(w[:, c:c + 1], (C, BHW))          # lane bcast
        n_row = jnp.broadcast_to(noisy[c:c + 1, :], (C, BHW))      # sublane bcast
        pred = pred + w_col * n_row
    # bias[o] (column) + t[b]/T (row), both broadcast adds.
    pred = pred + b_ref[...] + t_ref[...]
    pred_ref[...] = pred.astype(pred_ref.dtype)

    # --- L1 loss: one deferred full reduction -------------------------------
    loss_ref[...] = jnp.zeros_like(loss_ref) + jnp.sum(jnp.abs(pred - n)) * inv_total


@functools.partial(jax.jit, static_argnames=("T",))
def ddpm_fused_forward(x_start, noise, t, sqrt_ac, sqrt_1mac, w, bias, T):
    """Runs the fused DDPM training-step forward pass.

    Returns (noisy_img, noise_pred, loss) with images in NCHW.
    """
    B, C, H, W = x_start.shape
    HW = H * W
    BHW = B * HW

    # Channel-major, lane-dense layout: (C, B*HW).
    x_cf = jnp.transpose(x_start, (1, 0, 2, 3)).reshape(C, BHW).astype(jnp.float32)
    n_cf = jnp.transpose(noise, (1, 0, 2, 3)).reshape(C, BHW).astype(jnp.float32)

    # Per-batch schedule gathers done once here; replicated per pixel column so
    # the kernel only does broadcast multiplies/adds.
    sa_row = jnp.repeat(sqrt_ac[t], HW).reshape(1, BHW).astype(jnp.float32)
    s1_row = jnp.repeat(sqrt_1mac[t], HW).reshape(1, BHW).astype(jnp.float32)
    t_row = jnp.repeat(t.astype(jnp.float32) / jnp.float32(T), HW).reshape(1, BHW)
    b_col = bias.reshape(C, 1).astype(jnp.float32)

    inv_total = 1.0 / float(C * BHW)
    kernel = functools.partial(_fused_ddpm_kernel, C, BHW, inv_total)

    noisy_cf, pred_cf, loss = pl.pallas_call(
        kernel,
        out_shape=(
            jax.ShapeDtypeStruct((C, BHW), x_start.dtype),   # noisy image
            jax.ShapeDtypeStruct((C, BHW), x_start.dtype),   # predicted noise
            jax.ShapeDtypeStruct((1, 1), jnp.float32),       # L1 loss
        ),
        in_specs=[
            pl.BlockSpec(memory_space=pltpu.MemorySpace.VMEM),  # x_cf
            pl.BlockSpec(memory_space=pltpu.MemorySpace.VMEM),  # noise_cf
            pl.BlockSpec(memory_space=pltpu.MemorySpace.VMEM),  # sqrt_ac[t] row
            pl.BlockSpec(memory_space=pltpu.MemorySpace.VMEM),  # sqrt_1mac[t] row
            pl.BlockSpec(memory_space=pltpu.MemorySpace.VMEM),  # t/T row
            pl.BlockSpec(memory_space=pltpu.MemorySpace.VMEM),  # w (C,C)
            pl.BlockSpec(memory_space=pltpu.MemorySpace.VMEM),  # bias column
        ],
        out_specs=(
            pl.BlockSpec(memory_space=pltpu.MemorySpace.VMEM),
            pl.BlockSpec(memory_space=pltpu.MemorySpace.VMEM),
            pl.BlockSpec(memory_space=pltpu.MemorySpace.VMEM),
        ),
    )(x_cf, n_cf, sa_row, s1_row, t_row, w.astype(jnp.float32), b_col)

    noisy_img = jnp.transpose(noisy_cf.reshape(C, B, H, W), (1, 0, 2, 3))
    noise_pred = jnp.transpose(pred_cf.reshape(C, B, H, W), (1, 0, 2, 3))
    return noisy_img, noise_pred, loss[0, 0]


# ----------------------------------------------------------------------------
# DDPM module (buffers + forward), Pallas-backed
# ----------------------------------------------------------------------------
class DDPMPallas:
    def __init__(self, T, img_channels, img_size):
        self.T = T
        self.IMG_SIZE = img_size

        # beta_schedule == 'linear'
        betas = jnp.linspace(0.0001, 0.002, T, dtype=jnp.float32)
        alphas = 1.0 - betas
        alpha_cumprod = jnp.cumprod(alphas)
        alpha_cumprod_prev = jnp.concatenate(
            [jnp.ones((1,), jnp.float32), alpha_cumprod[:-1]]
        )
        self.betas = betas
        self.alpha_cumprod = alpha_cumprod
        self.alpha_cumprod_prev = alpha_cumprod_prev
        self.sqrt_alphas_cumprod = jnp.sqrt(alpha_cumprod)
        self.sqrt_one_minus_alphas_cumprod = jnp.sqrt(1.0 - alpha_cumprod)
        self.sqrt_recip_alphas = jnp.sqrt(1.0 / alphas)
        self.sqrt_recip_alphas_cumprod = jnp.sqrt(1.0 / alpha_cumprod)
        self.sqrt_recipm1_alphas_cumprod = jnp.sqrt(1.0 / alpha_cumprod - 1.0)
        posterior_variance = betas * (1.0 - alpha_cumprod_prev) / (1.0 - alpha_cumprod)
        self.posterior_variance = posterior_variance
        # torch .clamp(min=1e-20) equivalent (jnp.clip no longer accepts a_min=)
        self.posterior_log_variance_clipped = jnp.log(
            jnp.maximum(posterior_variance, 1e-20)
        )
        self.posterior_mean_coef1 = (
            betas * jnp.sqrt(alpha_cumprod_prev) / (1.0 - alpha_cumprod)
        )
        self.posterior_mean_coef2 = (
            (1.0 - alpha_cumprod_prev) * jnp.sqrt(alphas) / (1.0 - alpha_cumprod)
        )

        # Deterministic stand-in "model" parameters (Unet is undefined upstream).
        kw, kb = jax.random.split(jax.random.PRNGKey(42))
        C = img_channels
        self.model_w = (0.1 * jax.random.normal(kw, (C, C), jnp.float32)
                        + jnp.eye(C, dtype=jnp.float32))
        self.model_b = 0.01 * jax.random.normal(kb, (C,), jnp.float32)

    def forward(self, x_start, key):
        B = x_start.shape[0]
        k_t, k_noise = jax.random.split(key)
        t = jax.random.randint(k_t, (B,), 0, self.T, dtype=jnp.int32)
        noise = jax.random.normal(k_noise, x_start.shape, x_start.dtype)
        # q_sample + noise prediction + L1 loss, all in one fused Pallas kernel.
        noisy_img, noise_pred, loss = ddpm_fused_forward(
            x_start, noise, t,
            self.sqrt_alphas_cumprod, self.sqrt_one_minus_alphas_cumprod,
            self.model_w, self.model_b, self.T,
        )
        # TODO(synk): loss.backward() (autograd) not reproduced.
        return {
            "loss": loss,
            "t": t,
            "noise": noise,
            "noisy_img": noisy_img,
            "noise_pred": noise_pred,
        }


# ----------------------------------------------------------------------------
# Main: run once, reference-check in pure JAX, print KERNEL_OK
# ----------------------------------------------------------------------------
if __name__ == "__main__":
    B, C, H, W = 2, 4, 16, 16
    T = 100

    key = jax.random.PRNGKey(0)
    k_x, k_fwd = jax.random.split(key)
    x_start = jax.random.normal(k_x, (B, C, H, W), jnp.float32)

    ddpm = DDPMPallas(T=T, img_channels=C, img_size=H)
    out = ddpm.forward(x_start, k_fwd)
    jax.block_until_ready(out["loss"])

    # --- pure-JAX reference of the same forward pass ---
    t = out["t"]
    noise = out["noise"]
    sa = ddpm.sqrt_alphas_cumprod[t].reshape(B, 1, 1, 1)
    s1 = ddpm.sqrt_one_minus_alphas_cumprod[t].reshape(B, 1, 1, 1)
    noisy_ref = x_start * sa + noise * s1
    xf = noisy_ref.reshape(B, C, H * W)
    pred_ref = (jnp.einsum("oc,bcn->bon", ddpm.model_w, xf,
                           precision=jax.lax.Precision.HIGHEST)
                + ddpm.model_b.reshape(1, C, 1)
                + (t.astype(jnp.float32) / T).reshape(B, 1, 1)).reshape(B, C, H, W)
    loss_ref = jnp.mean(jnp.abs(pred_ref - noise))

    assert jnp.allclose(out["noisy_img"], noisy_ref, atol=1e-5, rtol=1e-5)
    assert jnp.allclose(out["noise_pred"], pred_ref, atol=1e-4, rtol=1e-4)
    assert jnp.allclose(out["loss"], loss_ref, atol=1e-5, rtol=1e-5)

    print("KERNEL_OK")
</pallas_src>

<mosaic_0001>
module attributes {stable_mosaic.version = 11 : i64} {
  func.func @_fused_ddpm_kernel(%arg0: memref<4x512xf32, #tpu.memory_space<vmem>>, %arg1: memref<4x512xf32, #tpu.memory_space<vmem>>, %arg2: memref<1x512xf32, #tpu.memory_space<vmem>>, %arg3: memref<1x512xf32, #tpu.memory_space<vmem>>, %arg4: memref<1x512xf32, #tpu.memory_space<vmem>>, %arg5: memref<4x4xf32, #tpu.memory_space<vmem>>, %arg6: memref<4x1xf32, #tpu.memory_space<vmem>>, %arg7: memref<4x512xf32, #tpu.memory_space<vmem>>, %arg8: memref<4x512xf32, #tpu.memory_space<vmem>>, %arg9: memref<1x1xf32, #tpu.memory_space<vmem>>) attributes {dimension_semantics = [], scalar_prefetch = 0 : i64, scratch_operands = 0 : i64, tpu.core_type = #tpu.core_type<tc>} {
    %c0 = arith.constant 0 : index
    %c0_0 = arith.constant 0 : index
    %0 = vector.load %arg0[%c0, %c0_0] : memref<4x512xf32, #tpu.memory_space<vmem>>, vector<4x512xf32>
    %c0_1 = arith.constant 0 : index
    %c0_2 = arith.constant 0 : index
    %1 = vector.load %arg1[%c0_1, %c0_2] : memref<4x512xf32, #tpu.memory_space<vmem>>, vector<4x512xf32>
    %c0_3 = arith.constant 0 : index
    %c0_4 = arith.constant 0 : index
    %2 = vector.load %arg2[%c0_3, %c0_4] : memref<1x512xf32, #tpu.memory_space<vmem>>, vector<1x512xf32>
    %3 = vector.broadcast %2 : vector<1x512xf32> to vector<4x512xf32>
    %4 = arith.mulf %0, %3 : vector<4x512xf32>
    %c0_5 = arith.constant 0 : index
    %c0_6 = arith.constant 0 : index
    %5 = vector.load %arg3[%c0_5, %c0_6] : memref<1x512xf32, #tpu.memory_space<vmem>>, vector<1x512xf32>
    %6 = vector.broadcast %5 : vector<1x512xf32> to vector<4x512xf32>
    %7 = arith.mulf %1, %6 : vector<4x512xf32>
    %8 = arith.addf %4, %7 : vector<4x512xf32>
    %c0_7 = arith.constant 0 : index
    %c0_8 = arith.constant 0 : index
    %9 = vector.load %arg7[%c0_7, %c0_8] : memref<4x512xf32, #tpu.memory_space<vmem>>, vector<4x512xf32>
    tpu.vector_store %arg7[%c0_7, %c0_8], %8 {strides = array<i32>} : memref<4x512xf32, #tpu.memory_space<vmem>>, vector<4x512xf32>,
    %c0_9 = arith.constant 0 : index
    %c0_10 = arith.constant 0 : index
    %10 = vector.load %arg5[%c0_9, %c0_10] : memref<4x4xf32, #tpu.memory_space<vmem>>, vector<4x4xf32>
    %cst = arith.constant 0.000000e+00 : f32
    %11 = vector.broadcast %cst : f32 to vector<4x512xf32>
    %12 = vector.extract_strided_slice %10 {offsets = [0, 0], sizes = [4, 1], strides = [1, 1]} : vector<4x4xf32> to vector<4x1xf32>
    %13 = vector.shape_cast %12 : vector<4x1xf32> to vector<4x1xf32>
    %14 = vector.broadcast %13 : vector<4x1xf32> to vector<4x512xf32>
    %15 = vector.extract_strided_slice %8 {offsets = [0, 0], sizes = [1, 512], strides = [1, 1]} : vector<4x512xf32> to vector<1x512xf32>
    %16 = vector.shape_cast %15 : vector<1x512xf32> to vector<1x512xf32>
    %17 = vector.broadcast %16 : vector<1x512xf32> to vector<4x512xf32>
    %18 = arith.mulf %14, %17 : vector<4x512xf32>
    %19 = arith.addf %11, %18 : vector<4x512xf32>
    %20 = vector.extract_strided_slice %10 {offsets = [0, 1], sizes = [4, 1], strides = [1, 1]} : vector<4x4xf32> to vector<4x1xf32>
    %21 = vector.shape_cast %20 : vector<4x1xf32> to vector<4x1xf32>
    %22 = vector.broadcast %21 : vector<4x1xf32> to vector<4x512xf32>
    %23 = vector.extract_strided_slice %8 {offsets = [1, 0], sizes = [1, 512], strides = [1, 1]} : vector<4x512xf32> to vector<1x512xf32>
    %24 = vector.shape_cast %23 : vector<1x512xf32> to vector<1x512xf32>
    %25 = vector.broadcast %24 : vector<1x512xf32> to vector<4x512xf32>
    %26 = arith.mulf %22, %25 : vector<4x512xf32>
    %27 = arith.addf %19, %26 : vector<4x512xf32>
    %28 = vector.extract_strided_slice %10 {offsets = [0, 2], sizes = [4, 1], strides = [1, 1]} : vector<4x4xf32> to vector<4x1xf32>
    %29 = vector.shape_cast %28 : vector<4x1xf32> to vector<4x1xf32>
    %30 = vector.broadcast %29 : vector<4x1xf32> to vector<4x512xf32>
    %31 = vector.extract_strided_slice %8 {offsets = [2, 0], sizes = [1, 512], strides = [1, 1]} : vector<4x512xf32> to vector<1x512xf32>
    %32 = vector.shape_cast %31 : vector<1x512xf32> to vector<1x512xf32>
    %33 = vector.broadcast %32 : vector<1x512xf32> to vector<4x512xf32>
    %34 = arith.mulf %30, %33 : vector<4x512xf32>
    %35 = arith.addf %27, %34 : vector<4x512xf32>
    %36 = vector.extract_strided_slice %10 {offsets = [0, 3], sizes = [4, 1], strides = [1, 1]} : vector<4x4xf32> to vector<4x1xf32>
    %37 = vector.shape_cast %36 : vector<4x1xf32> to vector<4x1xf32>
    %38 = vector.broadcast %37 : vector<4x1xf32> to vector<4x512xf32>
    %39 = vector.extract_strided_slice %8 {offsets = [3, 0], sizes = [1, 512], strides = [1, 1]} : vector<4x512xf32> to vector<1x512xf32>
    %40 = vector.shape_cast %39 : vector<1x512xf32> to vector<1x512xf32>
    %41 = vector.broadcast %40 : vector<1x512xf32> to vector<4x512xf32>
    %42 = arith.mulf %38, %41 : vector<4x512xf32>
    %43 = arith.addf %35, %42 : vector<4x512xf32>
    %c0_11 = arith.constant 0 : index
    %c0_12 = arith.constant 0 : index
    %44 = vector.load %arg6[%c0_11, %c0_12] : memref<4x1xf32, #tpu.memory_space<vmem>>, vector<4x1xf32>
    %45 = vector.broadcast %44 : vector<4x1xf32> to vector<4x512xf32>
    %46 = arith.addf %43, %45 : vector<4x512xf32>
    %c0_13 = arith.constant 0 : index
    %c0_14 = arith.constant 0 : index
    %47 = vector.load %arg4[%c0_13, %c0_14] : memref<1x512xf32, #tpu.memory_space<vmem>>, vector<1x512xf32>
    %48 = vector.broadcast %47 : vector<1x512xf32> to vector<4x512xf32>
    %49 = arith.addf %46, %48 : vector<4x512xf32>
    %c0_15 = arith.constant 0 : index
    %c0_16 = arith.constant 0 : index
    %50 = vector.load %arg8[%c0_15, %c0_16] : memref<4x512xf32, #tpu.memory_space<vmem>>, vector<4x512xf32>
    tpu.vector_store %arg8[%c0_15, %c0_16], %49 {strides = array<i32>} : memref<4x512xf32, #tpu.memory_space<vmem>>, vector<4x512xf32>,
    %cst_17 = arith.constant 0.000000e+00 : f32
    %51 = vector.broadcast %cst_17 : f32 to vector<1x1xf32>
    %52 = arith.subf %49, %1 : vector<4x512xf32>
    %53 = math.absf %52 : vector<4x512xf32>
    %54 = vector.shape_cast %53 : vector<4x512xf32> to vector<1x4x512xf32>
    %cst_18 = arith.constant dense<0.000000e+00> : vector<1xf32>
    %55 = vector.multi_reduction <add>, %54, %cst_18 [1, 2] : vector<1x4x512xf32> to vector<1xf32>
    %56 = vector.shape_cast %55 : vector<1xf32> to vector<1x1x1xf32>
    %57 = vector.extract %56[0, 0, 0] : f32 from vector<1x1x1xf32>
    %cst_19 = arith.constant 4.8828125E-4 : f32
    %58 = arith.mulf %57, %cst_19 : f32
    %59 = vector.broadcast %58 : f32 to vector<1x1xf32>
    %60 = arith.addf %51, %59 : vector<1x1xf32>
    %c0_20 = arith.constant 0 : index
    %c0_21 = arith.constant 0 : index
    %61 = vector.load %arg9[%c0_20, %c0_21] : memref<1x1xf32, #tpu.memory_space<vmem>>, vector<1x1xf32>
    tpu.vector_store %arg9[%c0_20, %c0_21], %60 {strides = array<i32>} : memref<1x1xf32, #tpu.memory_space<vmem>>, vector<1x1xf32>,
    return
  }
}

</mosaic_0001>

<llo_original>
// kernel: ddpm_fused_forward.1
$region0: #{ddpm_fused_forward.1}
  #allocation0 [shape = 'u32[]', space=smem, size = 0x4, offset = 0x4, fixed_abs, tag = 'smem constant byte address 0x4 - core index']
  #allocation1 [shape = 'u32[144,128]{1,0:T(1,128)}', space=vmem, size = 0x12000, scoped, tag = 'internal scratch']
  %s0 = inlined_call_operand.vmem [shape: f32[4,512], index: 0, kind: input, shape index: {}]
  %s1 = inlined_call_operand.vmem [shape: f32[4,512], index: 1, kind: input, shape index: {}]
  %s2 = inlined_call_operand.vmem [shape: f32[1,512], index: 2, kind: input, shape index: {}]
  %s3 = inlined_call_operand.vmem [shape: f32[1,512], index: 3, kind: input, shape index: {}]
  %s4 = inlined_call_operand.vmem [shape: f32[1,512], index: 4, kind: input, shape index: {}]
  %s5 = inlined_call_operand.vmem [shape: f32[4,4], index: 5, kind: input, shape index: {}]
  %s6 = inlined_call_operand.vmem [shape: f32[4,1], index: 6, kind: input, shape index: {}]
  %s7 = inlined_call_operand.vmem [shape: f32[4,512], index: 7, kind: output, shape index: {0}]
  %s8 = inlined_call_operand.vmem [shape: f32[4,512], index: 8, kind: output, shape index: {1}]
  %s9 = inlined_call_operand.hbm [shape: f32[1,1], index: 9, kind: output, shape index: {2}]
  %10 = xla_tuple %s7, %s8, %s9
  %s11 = sld [smem:[#allocation0]]
  $region54: #{ddpm_fused_forward.1} parent=0
    _
  %s13 = ssub.s32 1, %s11
  %s14 = scalar_select 0, %s13, %s11
  $region1: #{ddpm_fused_forward.1} parent=0
    #allocation2 [shape = 'u8[512]{0}', space=vmem, size = 0x400, scoped, tag = 'output window, operand 2, single buffered']
    #allocation3 [shape = 's32[1]{0}', space=sflag, size = 0x4, scoped, tag = 'scoped memory for ddpm_fused_forward.1']
    %15 = vsyncpa [#allocation3], 0
    // Predicated region
    $region2: #{ddpm_fused_forward.1} parent=1 // pred_check
      _
    $region3: #{ddpm_fused_forward.1} parent=1 // pred_check_branch
      %17 = sbr.rel (0) target = $region5
    $region4: #{ddpm_fused_forward.1} parent=1 // pred_region
      _
    $region5: #{ddpm_fused_forward.1} parent=1 // pred_fallthru
      _
    // Predicated region
    $region6: #{ddpm_fused_forward.1} parent=1 // pred_check
      _
    $region7: #{ddpm_fused_forward.1} parent=1 // pred_check_branch
      %19 = sbr.rel (0) target = $region9
    $region8: #{ddpm_fused_forward.1} parent=1 // pred_region
      _
    $region9: #{ddpm_fused_forward.1} parent=1 // pred_fallthru
      _
    // Predicated region
    $region10: #{ddpm_fused_forward.1} parent=1 // pred_check
      _
    $region11: #{ddpm_fused_forward.1} parent=1 // pred_check_branch
      %21 = sbr.rel (0) target = $region13
    $region12: #{ddpm_fused_forward.1} parent=1 // pred_region
      _
    $region13: #{ddpm_fused_forward.1} parent=1 // pred_fallthru
      _
    // Predicated region
    $region14: #{ddpm_fused_forward.1} parent=1 // pred_check
      _
    $region15: #{ddpm_fused_forward.1} parent=1 // pred_check_branch
      %23 = sbr.rel (0) target = $region17
    $region16: #{ddpm_fused_forward.1} parent=1 // pred_region
      _
    $region17: #{ddpm_fused_forward.1} parent=1 // pred_fallthru
      _
    // Predicated region
    $region18: #{ddpm_fused_forward.1} parent=1 // pred_check
      _
    $region19: #{ddpm_fused_forward.1} parent=1 // pred_check_branch
      %25 = sbr.rel (0) target = $region21
    $region20: #{ddpm_fused_forward.1} parent=1 // pred_region
      _
    $region21: #{ddpm_fused_forward.1} parent=1 // pred_fallthru
      _
    // Predicated region
    $region22: #{ddpm_fused_forward.1} parent=1 // pred_check
      _
    $region23: #{ddpm_fused_forward.1} parent=1 // pred_check_branch
      %27 = sbr.rel (0) target = $region25
    $region24: #{ddpm_fused_forward.1} parent=1 // pred_region
      _
    $region25: #{ddpm_fused_forward.1} parent=1 // pred_fallthru
      _
    // Predicated region
    $region26: #{ddpm_fused_forward.1} parent=1 // pred_check
      _
    $region27: #{ddpm_fused_forward.1} parent=1 // pred_check_branch
      %29 = sbr.rel (0) target = $region29
    $region28: #{ddpm_fused_forward.1} parent=1 // pred_region
      _
    $region29: #{ddpm_fused_forward.1} parent=1 // pred_fallthru
      _
    %v30 = vld [vmem:[%s0] sm:$0xff]
    %v31 = vld [vmem:[%s0 + $0x8] sm:$0xff]
    %v32 = vld [vmem:[%s1] sm:$0xff]
    %v33 = vld [vmem:[%s1 + $0x8] sm:$0xff]
    %v34 = vld [vmem:[%s2] sm:$0xf]
    %v36 = vlaneseq
    %v37 = vshrl.u32 %v36, 7
    %v38 = vsub.s32 0, %v37
    %v39 = vrot.slane %v34, %v38
    %v40 = vlaneseq
    %v41 = vshrl.u32 %v40, 7
    %v42 = vsub.s32 1, %v41
    %v43 = vrot.slane %v34, %v42
    %v44 = vlaneseq
    %v45 = vshrl.u32 %v44, 7
    %v46 = vsub.s32 2, %v45
    %v47 = vrot.slane %v34, %v46
    %v48 = vlaneseq
    %v49 = vshrl.u32 %v48, 7
    %v50 = vsub.s32 3, %v49
    %v51 = vrot.slane %v34, %v50
    %v52 = vcombine.low %v39, %v43
    %v53 = vcombine.low %v47, %v51
    %v56 = vmul.f32 %v30, %v52
    %v57 = vmul.f32 %v31, %v53
    %v58 = vld [vmem:[%s3] sm:$0xf]
    %v60 = vlaneseq
    %v61 = vshrl.u32 %v60, 7
    %v62 = vsub.s32 0, %v61
    %v63 = vrot.slane %v58, %v62
    %v64 = vlaneseq
    %v65 = vshrl.u32 %v64, 7
    %v66 = vsub.s32 1, %v65
    %v67 = vrot.slane %v58, %v66
    %v68 = vlaneseq
    %v69 = vshrl.u32 %v68, 7
    %v70 = vsub.s32 2, %v69
    %v71 = vrot.slane %v58, %v70
    %v72 = vlaneseq
    %v73 = vshrl.u32 %v72, 7
    %v74 = vsub.s32 3, %v73
    %v75 = vrot.slane %v58, %v74
    %v76 = vcombine.low %v63, %v67
    %v77 = vcombine.low %v71, %v75
    %v80 = vmul.f32 %v32, %v76
    %v81 = vmul.f32 %v33, %v77
    %v82 = vadd.f32 %v56, %v80
    %v83 = vadd.f32 %v57, %v81
    %84 = vst [vmem:[%s7] sm:$0xff] %v82
    %85 = vst [vmem:[%s7 + $0x8] sm:$0xff] %v83
    %v86 = vld [vmem:[%s5] sm:$0xf]
    %88 = vset.pattern.permute.xlu0 0
    %89 = vperm.xlu0 %88, %v86
    %v90 = vpop.permute.xlu0 %89
    %v94 = vlaneseq
    %v95 = vshrl.u32 %v94, 7
    %v96 = vsub.s32 0, %v95
    %v97 = vrot.slane %v82, %v96
    %v98 = vlaneseq
    %v99 = vshrl.u32 %v98, 7
    %v100 = vsub.s32 4, %v99
    %v101 = vrot.slane %v82, %v100
    %v102 = vlaneseq
    %v103 = vshrl.u32 %v102, 7
    %v104 = vsub.s32 0, %v103
    %v105 = vrot.slane %v83, %v104
    %v106 = vlaneseq
    %v107 = vshrl.u32 %v106, 7
    %v108 = vsub.s32 4, %v107
    %v109 = vrot.slane %v83, %v108
    %v114 = vlaneseq
    %v115 = vshrl.u32 %v114, 7
    %v116 = vsub.s32 0, %v115
    %v117 = vrot.slane %v97, %v116
    %v118 = vlaneseq
    %v119 = vshrl.u32 %v118, 7
    %v120 = vsub.s32 0, %v119
    %v121 = vrot.slane %v101, %v120
    %v122 = vlaneseq
    %v123 = vshrl.u32 %v122, 7
    %v124 = vsub.s32 0, %v123
    %v125 = vrot.slane %v105, %v124
    %v126 = vlaneseq
    %v127 = vshrl.u32 %v126, 7
    %v128 = vsub.s32 0, %v127
    %v129 = vrot.slane %v109, %v128
    %v130 = vmul.f32 %v90, %v117
    %v131 = vmul.f32 %v90, %v121
    %v132 = vmul.f32 %v90, %v125
    %v133 = vmul.f32 %v90, %v129
    %v134 = vadd.f32 %v130, 0.0
    %v135 = vadd.f32 %v131, 0.0
    %v136 = vadd.f32 %v132, 0.0
    %v137 = vadd.f32 %v133, 0.0
    %138 = vset.pattern.permute.xlu0 1
    %139 = vperm.xlu0 %138, %v86
    %v140 = vpop.permute.xlu0 %139
    %v142 = vlaneseq
    %v143 = vshrl.u32 %v142, 7
    %v144 = vsub.s32 1, %v143
    %v145 = vrot.slane %v82, %v144
    %v146 = vlaneseq
    %v147 = vshrl.u32 %v146, 7
    %v148 = vsub.s32 5, %v147
    %v149 = vrot.slane %v82, %v148
    %v150 = vlaneseq
    %v151 = vshrl.u32 %v150, 7
    %v152 = vsub.s32 1, %v151
    %v153 = vrot.slane %v83, %v152
    %v154 = vlaneseq
    %v155 = vshrl.u32 %v154, 7
    %v156 = vsub.s32 5, %v155
    %v157 = vrot.slane %v83, %v156
    %v162 = vlaneseq
    %v163 = vshrl.u32 %v162, 7
    %v164 = vsub.s32 1, %v163
    %v165 = vrot.slane %v145, %v164
    %v166 = vlaneseq
    %v167 = vshrl.u32 %v166, 7
    %v168 = vsub.s32 1, %v167
    %v169 = vrot.slane %v149, %v168
    %v170 = vlaneseq
    %v171 = vshrl.u32 %v170, 7
    %v172 = vsub.s32 1, %v171
    %v173 = vrot.slane %v153, %v172
    %v174 = vlaneseq
    %v175 = vshrl.u32 %v174, 7
    %v176 = vsub.s32 1, %v175
    %v177 = vrot.slane %v157, %v176
    %v178 = vmul.f32 %v140, %v165
    %v179 = vmul.f32 %v140, %v169
    %v180 = vmul.f32 %v140, %v173
    %v181 = vmul.f32 %v140, %v177
    %v182 = vadd.f32 %v134, %v178
    %v183 = vadd.f32 %v135, %v179
    %v184 = vadd.f32 %v136, %v180
    %v185 = vadd.f32 %v137, %v181
    %186 = vset.pattern.permute.xlu0 2
    %187 = vperm.xlu0 %186, %v86
    %v188 = vpop.permute.xlu0 %187
    %v190 = vlaneseq
    %v191 = vshrl.u32 %v190, 7
    %v192 = vsub.s32 2, %v191
    %v193 = vrot.slane %v82, %v192
    %v194 = vlaneseq
    %v195 = vshrl.u32 %v194, 7
    %v196 = vsub.s32 6, %v195
    %v197 = vrot.slane %v82, %v196
    %v198 = vlaneseq
    %v199 = vshrl.u32 %v198, 7
    %v200 = vsub.s32 2, %v199
    %v201 = vrot.slane %v83, %v200
    %v202 = vlaneseq
    %v203 = vshrl.u32 %v202, 7
    %v204 = vsub.s32 6, %v203
    %v205 = vrot.slane %v83, %v204
    %v210 = vlaneseq
    %v211 = vshrl.u32 %v210, 7
    %v212 = vsub.s32 2, %v211
    %v213 = vrot.slane %v193, %v212
    %v214 = vlaneseq
    %v215 = vshrl.u32 %v214, 7
    %v216 = vsub.s32 2, %v215
    %v217 = vrot.slane %v197, %v216
    %v218 = vlaneseq
    %v219 = vshrl.u32 %v218, 7
    %v220 = vsub.s32 2, %v219
    %v221 = vrot.slane %v201, %v220
    %v222 = vlaneseq
    %v223 = vshrl.u32 %v222, 7
    %v224 = vsub.s32 2, %v223
    %v225 = vrot.slane %v205, %v224
    %v226 = vmul.f32 %v188, %v213
    %v227 = vmul.f32 %v188, %v217
    %v228 = vmul.f32 %v188, %v221
    %v229 = vmul.f32 %v188, %v225
    %v230 = vadd.f32 %v182, %v226
    %v231 = vadd.f32 %v183, %v227
    %v232 = vadd.f32 %v184, %v228
    %v233 = vadd.f32 %v185, %v229
    %234 = vset.pattern.permute.xlu0 3
    %235 = vperm.xlu0 %234, %v86
    %v236 = vpop.permute.xlu0 %235
    %v238 = vlaneseq
    %v239 = vshrl.u32 %v238, 7
    %v240 = vsub.s32 3, %v239
    %v241 = vrot.slane %v82, %v240
    %v242 = vlaneseq
    %v243 = vshrl.u32 %v242, 7
    %v244 = vsub.s32 7, %v243
    %v245 = vrot.slane %v82, %v244
    %v246 = vlaneseq
    %v247 = vshrl.u32 %v246, 7
    %v248 = vsub.s32 3, %v247
    %v249 = vrot.slane %v83, %v248
    %v250 = vlaneseq
    %v251 = vshrl.u32 %v250, 7
    %v252 = vsub.s32 7, %v251
    %v253 = vrot.slane %v83, %v252
    %v258 = vlaneseq
    %v259 = vshrl.u32 %v258, 7
    %v260 = vsub.s32 3, %v259
    %v261 = vrot.slane %v241, %v260
    %v262 = vlaneseq
    %v263 = vshrl.u32 %v262, 7
    %v264 = vsub.s32 3, %v263
    %v265 = vrot.slane %v245, %v264
    %v266 = vlaneseq
    %v267 = vshrl.u32 %v266, 7
    %v268 = vsub.s32 3, %v267
    %v269 = vrot.slane %v249, %v268
    %v270 = vlaneseq
    %v271 = vshrl.u32 %v270, 7
    %v272 = vsub.s32 3, %v271
    %v273 = vrot.slane %v253, %v272
    %v274 = vmul.f32 %v236, %v261
    %v275 = vmul.f32 %v236, %v265
    %v276 = vmul.f32 %v236, %v269
    %v277 = vmul.f32 %v236, %v273
    %v278 = vadd.f32 %v230, %v274
    %v279 = vadd.f32 %v231, %v275
    %v280 = vadd.f32 %v232, %v276
    %v281 = vadd.f32 %v233, %v277
    %v282 = vld [vmem:[%s6] sm:$0xf]
    %284 = vset.pattern.permute.xlu0 0
    %285 = vperm.xlu0 %284, %v282
    %v286 = vpop.permute.xlu0 %285
    %v288 = vadd.f32 %v278, %v286
    %v289 = vadd.f32 %v279, %v286
    %v290 = vadd.f32 %v280, %v286
    %v291 = vadd.f32 %v281, %v286
    %v292 = vld [vmem:[%s4] sm:$0xf]
    %v294 = vlaneseq
    %v295 = vshrl.u32 %v294, 7
    %v296 = vsub.s32 0, %v295
    %v297 = vrot.slane %v292, %v296
    %v298 = vlaneseq
    %v299 = vshrl.u32 %v298, 7
    %v300 = vsub.s32 1, %v299
    %v301 = vrot.slane %v292, %v300
    %v302 = vlaneseq
    %v303 = vshrl.u32 %v302, 7
    %v304 = vsub.s32 2, %v303
    %v305 = vrot.slane %v292, %v304
    %v306 = vlaneseq
    %v307 = vshrl.u32 %v306, 7
    %v308 = vsub.s32 3, %v307
    %v309 = vrot.slane %v292, %v308
    %v314 = vadd.f32 %v288, %v297
    %v315 = vadd.f32 %v289, %v301
    %v316 = vadd.f32 %v290, %v305
    %v317 = vadd.f32 %v291, %v309
    %v322 = vcombine.low %v314, %v315
    %v323 = vcombine.low %v316, %v317
    %326 = vst [vmem:[%s8] sm:$0xff] %v322
    %327 = vst [vmem:[%s8 + $0x8] sm:$0xff] %v323
    %v330 = vcombine.high %v32, %v32
    %v331 = vcombine.high %v33, %v33
    %v334 = vsub.f32 %v314, %v32
    %v335 = vsub.f32 %v315, %v330
    %v336 = vsub.f32 %v316, %v33
    %v337 = vsub.f32 %v317, %v331
    %v338 = vand.u32 2147483647, %v334
    %v339 = vand.u32 2147483647, %v335
    %v340 = vand.u32 2147483647, %v336
    %v341 = vand.u32 2147483647, %v337
    %vm342 = vcmask 1043456
    %v343 = vsel %vm342, %v338, 0.0
    %v344 = vsel %vm342, %v339, 0.0
    %v345 = vadd.f32 %v343, %v344
    %v346 = vsel %vm342, %v340, 0.0
    %v347 = vadd.f32 %v345, %v346
    %v348 = vsel %vm342, %v341, 0.0
    %v349 = vadd.f32 %v347, %v348
    %350 = vadd.xlane.f32.xlu0 %v349
    %v351 = vpop.xlane.xlu0 %350
    %v352 = vrot.slane %v351, 4
    %v353 = vadd.f32 %v351, %v352
    %v354 = vrot.slane %v353, 2
    %v355 = vadd.f32 %v353, %v354
    %v356 = vrot.slane %v355, 1
    %v357 = vadd.f32 %v355, %v356
    %s358 = vtos %v357
    %s359 = smul.f32 %s358, 0.00048828125
    %v360 = vstv %s359
    %v361 = vadd.f32 %v360, 0.0
    %vm362 = vcmask 0
    %363 = vst.msk [vmem:[#allocation2] sm:$0x1] %vm362, %v361
    // Predicated region
    $region30: #{ddpm_fused_forward.1} parent=1 // pred_check
      _
    $region31: #{ddpm_fused_forward.1} parent=1 // pred_check_branch
      %365 = sbr.rel (0) target = $region33
    $region32: #{ddpm_fused_forward.1} parent=1 // pred_region
      _
    $region33: #{ddpm_fused_forward.1} parent=1 // pred_fallthru
      _
    // Predicated region
    $region34: #{ddpm_fused_forward.1} parent=1 // pred_check
      _
    $region35: #{ddpm_fused_forward.1} parent=1 // pred_check_branch
      %367 = sbr.rel (0) target = $region37
    $region36: #{ddpm_fused_forward.1} parent=1 // pred_region
      _
    $region37: #{ddpm_fused_forward.1} parent=1 // pred_fallthru
      _
    // Predicated region
    $region38: #{ddpm_fused_forward.1} parent=1 // pred_check
      _
    $region39: #{ddpm_fused_forward.1} parent=1 // pred_check_branch
      %369 = sbr.rel (0) target = $region41
    $region40: #{ddpm_fused_forward.1} parent=1 // pred_region
      %s371 = ssub.s32 16, 16
      %372 = vsyncadd [#allocation3], %s371
      %s374 = sshll.u32 [#allocation2], 4
      %s375 = int_to_ptr.vmem [resolvable:$true] %s374
      %377 = dma.vmem_to_hbm [thread:$0]  %s375, 16, %s9, [#allocation3]
    $region41: #{ddpm_fused_forward.1} parent=1 // pred_fallthru
      _
    // Predicated region
    $region42: #{ddpm_fused_forward.1} parent=1 // pred_check
      _
    $region43: #{ddpm_fused_forward.1} parent=1 // pred_check_branch
      %379 = sbr.rel (0) target = $region45
    $region44: #{ddpm_fused_forward.1} parent=1 // pred_region
      _
    $region45: #{ddpm_fused_forward.1} parent=1 // pred_fallthru
      _
    // Predicated region
    $region46: #{ddpm_fused_forward.1} parent=1 // pred_check
      _
    $region47: #{ddpm_fused_forward.1} parent=1 // pred_check_branch
      %381 = sbr.rel (0) target = $region49
    $region48: #{ddpm_fused_forward.1} parent=1 // pred_region
      _
    $region49: #{ddpm_fused_forward.1} parent=1 // pred_fallthru
      _
    // Predicated region
    $region50: #{ddpm_fused_forward.1} parent=1 // pred_check
      _
    $region51: #{ddpm_fused_forward.1} parent=1 // pred_check_branch
      %383 = sbr.rel (0) target = $region53
    $region52: #{ddpm_fused_forward.1} parent=1 // pred_region
      %384 = dma.done [#allocation3], 16
    $region53: #{ddpm_fused_forward.1} parent=1 // pred_fallthru
      _
    %385 = vsyncpa [#allocation3], 1

</llo_original>
